<compile_context>
chip_gen: v5e
topology: v5e:2x2
jax: 0.10.0
libtpu: 0.0.40
codegen_flags: <defaults>
</compile_context>

<pallas_src>
import numpy as np
import jax
import jax.numpy as jnp
from jax.experimental import pallas as pl
from jax.experimental.pallas import tpu as pltpu


# ------------------------------ fused kernel ---------------------------------
def _make_encoder_kernel(b_block, m):
    """b_block: images per grid step.  m = H/8 (rows per image per phase)."""
    mb = b_block * m
    bf16 = jnp.bfloat16
    f32 = jnp.float32

    # rows are ordered (j-major, image-minor): row = j*B + b, so a shift by B rows
    # moves to row j+-1 of the SAME image; the vacated rows are the conv's zero pad.
    def shift_dn(a):                       # row j <- row j-1 ; j==0 <- zeros
        z = jnp.zeros((b_block, a.shape[1]), a.dtype)
        return z if m == 1 else jnp.concatenate([z, a[:mb - b_block]], axis=0)

    def shift_up(a):                       # row j <- row j+1 ; j==m-1 <- zeros
        z = jnp.zeros((b_block, a.shape[1]), a.dtype)
        return z if m == 1 else jnp.concatenate([a[b_block:], z], axis=0)

    def kernel(lhs1_ref, w1_ref, b1_ref, w2_ref, b2_ref, w3_ref, b3_ref, o_ref):
        # -------- layer 1: all Ho1 output rows (4 row-phases) in ONE dot --------
        y1 = jnp.dot(lhs1_ref[...], w1_ref[...], preferred_element_type=f32)
        y1 = jnp.maximum(y1 + b1_ref[...], 0.0)              # (4*mb, K1out) f32
        p0 = y1[0 * mb:1 * mb]                                # layer-1 rows 4j+0
        p1 = y1[1 * mb:2 * mb]                                # rows 4j+1
        p2 = y1[2 * mb:3 * mb]                                # rows 4j+2
        p3 = y1[3 * mb:4 * mb]                                # rows 4j+3

        # -------- layer 2: even + odd output rows stacked -> ONE dot --------
        lhs2 = jnp.concatenate(
            [jnp.concatenate([shift_dn(p3), p0, p1, p2], axis=1),   # rows 2j
             jnp.concatenate([p1, p2, p3, shift_up(p0)], axis=1)],  # rows 2j+1
            axis=0)                                          # (2*mb, 4*K1out)
        y2 = jnp.dot(lhs2.astype(bf16), w2_ref[...], preferred_element_type=f32)
        y2 = jnp.maximum(y2 + b2_ref[...], 0.0)              # (2*mb, K2out) f32
        ev = y2[:mb]                                         # layer-2 rows 2j
        od = y2[mb:]                                         # layer-2 rows 2j+1

        # -------- layer 3: ONE dot --------
        lhs3 = jnp.concatenate([shift_dn(od), ev, od, shift_up(ev)], axis=1)
        y3 = jnp.dot(lhs3.astype(bf16), w3_ref[...], preferred_element_type=f32)
        o_ref[...] = jnp.maximum(y3 + b3_ref[...], 0.0)      # (mb, K3out) f32

    return kernel


# ------------------------------ wrapper helpers -------------------------------
def _stacked_toeplitz(weight, w_in, k_pad):
    """PyTorch conv weight (C_out, C_in, 4, 4) -> (4*k_pad, W_out*C_out).
    Folds the k=4, s=2, p=1 sliding window + zero padding along W into a matmul;
    the 4 kernel rows (kh) are stacked along the contraction dimension."""
    c_out, c_in, n_kh, n_kw = weight.shape
    w_out = w_in // 2
    wt = jnp.transpose(weight.astype(jnp.float32), (2, 3, 1, 0))   # (kh,kw,Cin,Cout)
    kws = np.arange(n_kw)[:, None, None]
    ws_ = np.arange(w_in)[None, :, None]
    ows = np.arange(w_out)[None, None, :]
    sel = jnp.asarray((ws_ == 2 * ows + kws - 1).astype(np.float32))  # (kw,Win,Wout)
    t = jnp.einsum('qwv,kqcd->kwcvd', sel, wt)           # (kh, Win, Cin, Wout, Cout)
    t = t.reshape(n_kh, w_in * c_in, w_out * c_out)
    if k_pad > w_in * c_in:
        t = jnp.pad(t, ((0, 0), (0, k_pad - w_in * c_in), (0, 0)))
    return t.reshape(n_kh * k_pad, w_out * c_out)


def _build_lhs1(x, b_block, k_pad):
    """(N, C, H, W) -> (N/B, 4*m*B, 4*k_pad) bf16 layer-1 LHS.
    Row index = q*(m*B) + j*B + b (output row 4j+q of image b); lane block kh
    holds padded-input row 8j+2q+kh, lane-dense (W*C, zero-padded to k_pad)."""
    n, c, h, w = x.shape
    m = h // 8
    xs = jnp.transpose(x, (0, 2, 3, 1)).reshape(n, h, w * c).astype(jnp.float32)
    xs = jnp.pad(xs, ((0, 0), (1, 1), (0, k_pad - w * c)))          # (N, H+2, k_pad)
    q = np.arange(4)[:, None, None]
    j = np.arange(m)[None, :, None]
    kh = np.arange(4)[None, None, :]
    rows = jnp.asarray((8 * j + 2 * q + kh).reshape(-1))            # (4*m*4,)
    gat = jnp.take(xs, rows, axis=1)                                # (N, 4*m*4, K)
    gat = gat.reshape(n // b_block, b_block, 4, m, 4, k_pad)
    gat = jnp.transpose(gat, (0, 2, 3, 1, 4, 5))                    # (G,q,j,b,kh,K)
    return gat.reshape(n // b_block, 4 * m * b_block, 4 * k_pad).astype(jnp.bfloat16)


def _pick_batch_block(n, m):
    """Biggest divisor of n that gives the main dot M=4*m*B >= ~256, but keep
    >=2 grid steps (v7x dual-TC) when that still allows M >= 128."""
    cap = max(1, -(-256 // (4 * m)))
    divs = [d for d in range(1, n + 1) if n % d == 0]
    b = max([d for d in divs if d <= cap], default=1)
    if n // b < 2:
        alt = [d for d in divs if n // d >= 2 and 4 * m * d >= 128]
        if alt:
            b = max(alt)
    return b


# ------------------------------ forward (public) ------------------------------
def vae_encoder_forward(x, params):
    """x: (N, C_in, H, W) float32 NCHW; params: [(w, b)] * 3 (PyTorch layout)."""
    n, c_in, h, w = x.shape
    assert h % 8 == 0 and w % 8 == 0, "H, W must be divisible by 8 (3 stride-2 convs)"
    assert len(params) == 3

    m = h // 8
    chans = [c_in] + [pw.shape[0] for (pw, _) in params]          # [C0, 16, 32, 64]
    ws = [w // (2 ** i) for i in range(4)]
    hos = [h // (2 ** i) for i in range(4)]

    k1 = ws[0] * chans[0]
    k1p = ((k1 + 127) // 128) * 128                               # lane-pad layer-1 K
    k_out = [ws[i + 1] * chans[i + 1] for i in range(3)]          # per-layer N dims
    k_in_pad = [k1p, k_out[0], k_out[1]]                          # per-layer K blocks

    b_block = _pick_batch_block(n, m)
    g = n // b_block
    mb = b_block * m

    # weights (bf16, block-Toeplitz stacked over kh) and lane-tiled biases (f32)
    w_full = [_stacked_toeplitz(pw, ws[i], k_in_pad[i]).astype(jnp.bfloat16)
              for i, (pw, _) in enumerate(params)]
    b_full = [jnp.tile(pb.astype(jnp.float32), ws[i + 1]).reshape(1, k_out[i])
              for i, (_, pb) in enumerate(params)]

    lhs1 = _build_lhs1(x, b_block, k1p)                           # (G, 4*mb, 4*k1p)

    # true convolution FLOPs / bytes (not Toeplitz-inflated)
    flops = 2 * n * sum(hos[i + 1] * ws[i + 1] * chans[i + 1] * 16 * chans[i]
                        for i in range(3))
    bytes_acc = (lhs1.size * 2 + sum(wf.size * 2 for wf in w_full)
                 + sum(bf.size * 4 for bf in b_full) + n * hos[3] * k_out[2] * 4)

    kernel = _make_encoder_kernel(b_block, m)
    out = pl.pallas_call(
        kernel,
        out_shape=jax.ShapeDtypeStruct((g, mb, k_out[2]), jnp.float32),
        grid=(g,),
        in_specs=[
            pl.BlockSpec((None, 4 * mb, 4 * k1p), lambda i: (i, 0, 0)),
            pl.BlockSpec((4 * k_in_pad[0], k_out[0]), lambda i: (0, 0)),
            pl.BlockSpec((1, k_out[0]), lambda i: (0, 0)),
            pl.BlockSpec((4 * k_in_pad[1], k_out[1]), lambda i: (0, 0)),
            pl.BlockSpec((1, k_out[1]), lambda i: (0, 0)),
            pl.BlockSpec((4 * k_in_pad[2], k_out[2]), lambda i: (0, 0)),
            pl.BlockSpec((1, k_out[2]), lambda i: (0, 0)),
        ],
        out_specs=pl.BlockSpec((None, mb, k_out[2]), lambda i: (i, 0, 0)),
        compiler_params=pltpu.CompilerParams(dimension_semantics=("parallel",)),
        cost_estimate=pl.CostEstimate(flops=int(flops), transcendentals=0,
                                      bytes_accessed=int(bytes_acc)),
    )(lhs1, w_full[0], b_full[0], w_full[1], b_full[1], w_full[2], b_full[2])

    # (G, m*B, Wo3*C3) with rows=(j, b), lanes=(ow, c)  ->  NCHW
    out = out.reshape(g, m, b_block, ws[3], chans[3])
    out = jnp.transpose(out, (0, 2, 4, 1, 3)).reshape(n, chans[3], hos[3], ws[3])
    return out


# ------------------------------ params / reference ----------------------------
def init_vae_encoder_params(key, input_channels=3):
    """Matches nn.Conv2d default init (uniform +-1/sqrt(fan_in))."""
    dims = [(input_channels, 16), (16, 32), (32, 64)]
    params = []
    for i, (cin, cout) in enumerate(dims):
        kw_key, kb_key = jax.random.split(jax.random.fold_in(key, i))
        bound = 1.0 / float(np.sqrt(cin * 4 * 4))
        w = jax.random.uniform(kw_key, (cout, cin, 4, 4), jnp.float32,
                               minval=-bound, maxval=bound)
        b = jax.random.uniform(kb_key, (cout,), jnp.float32,
                               minval=-bound, maxval=bound)
        params.append((w, b))
    return params


def _vae_encoder_ref(x, params, bf16_operands=False):
    a = x
    for (w, b) in params:
        lhs, rhs = a, w
        if bf16_operands:  # mimic the kernel's bf16 dot operands (f32 accumulation)
            lhs = lhs.astype(jnp.bfloat16).astype(jnp.float32)
            rhs = rhs.astype(jnp.bfloat16).astype(jnp.float32)
        y = jax.lax.conv_general_dilated(
            lhs, rhs, window_strides=(2, 2), padding=[(1, 1), (1, 1)],
            dimension_numbers=("NCHW", "OIHW", "NCHW"),
            precision=jax.lax.Precision.HIGHEST)
        a = jnp.maximum(y + b[None, :, None, None], 0.0)
    return a


if __name__ == "__main__":
    key = jax.random.PRNGKey(0)
    x_key, p_key = jax.random.split(key)

    # batch=2, channels=3 (module default), 16x16 image -> (2, 64, 2, 2)
    x = jax.random.normal(x_key, (2, 3, 16, 16), dtype=jnp.float32)
    params = init_vae_encoder_params(p_key, input_channels=3)

    fwd = jax.jit(vae_encoder_forward)
    out = jax.block_until_ready(fwd(x, params))
    assert out.shape == (2, 64, 2, 2), out.shape

    # strict check: reference with the same bf16 operand rounding the kernel uses
    ref_bf16 = _vae_encoder_ref(x, params, bf16_operands=True)
    err_strict = float(jnp.max(jnp.abs(out - ref_bf16)))
    assert err_strict < 2e-3, f"strict err {err_strict}"

    # loose check against the pure-f32 PyTorch-equivalent reference
    ref_f32 = _vae_encoder_ref(x, params, bf16_operands=False)
    err_f32 = float(jnp.max(jnp.abs(out - ref_f32)))
    assert err_f32 < 6e-2, f"f32 err {err_f32}"

    print("KERNEL_OK")
</pallas_src>

<mosaic_0001>
module attributes {stable_mosaic.version = 11 : i64} {
  func.func @kernel(%arg0: i32, %arg1: memref<1x16x512xbf16, #tpu.memory_space<vmem>>, %arg2: memref<512x128xbf16, #tpu.memory_space<vmem>>, %arg3: memref<1x128xf32, #tpu.memory_space<vmem>>, %arg4: memref<512x128xbf16, #tpu.memory_space<vmem>>, %arg5: memref<1x128xf32, #tpu.memory_space<vmem>>, %arg6: memref<512x128xbf16, #tpu.memory_space<vmem>>, %arg7: memref<1x128xf32, #tpu.memory_space<vmem>>, %arg8: memref<1x4x128xf32, #tpu.memory_space<vmem>>) attributes {dimension_semantics = [#tpu.dimension_semantics<parallel>], iteration_bounds = array<i64: 1>, scalar_prefetch = 0 : i64, scratch_operands = 0 : i64, tpu.core_type = #tpu.core_type<tc>, window_params = [{transform_indices = @transform_0, window_bounds = array<i64: 1, 16, 512>}, {pipeline_mode = #tpu.pipeline_mode<synchronous>, transform_indices = @transform_1, window_bounds = array<i64: 512, 128>}, {pipeline_mode = #tpu.pipeline_mode<synchronous>, transform_indices = @transform_2, window_bounds = array<i64: 1, 128>}, {pipeline_mode = #tpu.pipeline_mode<synchronous>, transform_indices = @transform_3, window_bounds = array<i64: 512, 128>}, {pipeline_mode = #tpu.pipeline_mode<synchronous>, transform_indices = @transform_4, window_bounds = array<i64: 1, 128>}, {pipeline_mode = #tpu.pipeline_mode<synchronous>, transform_indices = @transform_5, window_bounds = array<i64: 512, 128>}, {pipeline_mode = #tpu.pipeline_mode<synchronous>, transform_indices = @transform_6, window_bounds = array<i64: 1, 128>}, {transform_indices = @transform_7, window_bounds = array<i64: 1, 4, 128>}]} {
    %c0 = arith.constant 0 : index
    %c0_0 = arith.constant 0 : index
    %c0_1 = arith.constant 0 : index
    %0 = vector.load %arg1[%c0, %c0_0, %c0_1] : memref<1x16x512xbf16, #tpu.memory_space<vmem>>, vector<1x16x512xbf16>
    %1 = vector.shape_cast %0 : vector<1x16x512xbf16> to vector<16x512xbf16>
    %c0_2 = arith.constant 0 : index
    %c0_3 = arith.constant 0 : index
    %2 = vector.load %arg2[%c0_2, %c0_3] : memref<512x128xbf16, #tpu.memory_space<vmem>>, vector<512x128xbf16>
    %cst = arith.constant dense<0.000000e+00> : vector<16x128xf32>
    %3 = tpu.matmul %1, %2, %cst {dimension_numbers = #tpu.dot_dimension_numbers<[1], [0], [0], [1], [0, 0, 1, 1], [], []>} : vector<16x512xbf16>, vector<512x128xbf16>, vector<16x128xf32> -> vector<16x128xf32>
    %c0_4 = arith.constant 0 : index
    %c0_5 = arith.constant 0 : index
    %4 = vector.load %arg3[%c0_4, %c0_5] : memref<1x128xf32, #tpu.memory_space<vmem>>, vector<1x128xf32>
    %5 = vector.broadcast %4 : vector<1x128xf32> to vector<16x128xf32>
    %6 = arith.addf %3, %5 : vector<16x128xf32>
    %cst_6 = arith.constant 0.000000e+00 : f32
    %7 = vector.broadcast %cst_6 : f32 to vector<16x128xf32>
    %8 = arith.maximumf %6, %7 : vector<16x128xf32>
    %9 = vector.extract_strided_slice %8 {offsets = [0, 0], sizes = [4, 128], strides = [1, 1]} : vector<16x128xf32> to vector<4x128xf32>
    %10 = vector.extract_strided_slice %8 {offsets = [4, 0], sizes = [4, 128], strides = [1, 1]} : vector<16x128xf32> to vector<4x128xf32>
    %11 = vector.extract_strided_slice %8 {offsets = [8, 0], sizes = [4, 128], strides = [1, 1]} : vector<16x128xf32> to vector<4x128xf32>
    %12 = vector.extract_strided_slice %8 {offsets = [12, 0], sizes = [4, 128], strides = [1, 1]} : vector<16x128xf32> to vector<4x128xf32>
    %cst_7 = arith.constant 0.000000e+00 : f32
    %13 = vector.broadcast %cst_7 : f32 to vector<2x128xf32>
    %14 = vector.extract_strided_slice %12 {offsets = [0, 0], sizes = [2, 128], strides = [1, 1]} : vector<4x128xf32> to vector<2x128xf32>
    %15 = tpu.concatenate %13, %14 in 0 : vector<2x128xf32>, vector<2x128xf32> -> vector<4x128xf32>
    %16 = tpu.concatenate %15, %9, %10, %11 in 1 : vector<4x128xf32>, vector<4x128xf32>, vector<4x128xf32>, vector<4x128xf32> -> vector<4x512xf32>
    %cst_8 = arith.constant 0.000000e+00 : f32
    %17 = vector.broadcast %cst_8 : f32 to vector<2x128xf32>
    %18 = vector.extract_strided_slice %9 {offsets = [2, 0], sizes = [2, 128], strides = [1, 1]} : vector<4x128xf32> to vector<2x128xf32>
    %19 = tpu.concatenate %18, %17 in 0 : vector<2x128xf32>, vector<2x128xf32> -> vector<4x128xf32>
    %20 = tpu.concatenate %10, %11, %12, %19 in 1 : vector<4x128xf32>, vector<4x128xf32>, vector<4x128xf32>, vector<4x128xf32> -> vector<4x512xf32>
    %21 = tpu.concatenate %16, %20 in 0 : vector<4x512xf32>, vector<4x512xf32> -> vector<8x512xf32>
    %22 = arith.truncf %21 : vector<8x512xf32> to vector<8x512xbf16>
    %c0_9 = arith.constant 0 : index
    %c0_10 = arith.constant 0 : index
    %23 = vector.load %arg4[%c0_9, %c0_10] : memref<512x128xbf16, #tpu.memory_space<vmem>>, vector<512x128xbf16>
    %cst_11 = arith.constant dense<0.000000e+00> : vector<8x128xf32>
    %24 = tpu.matmul %22, %23, %cst_11 {dimension_numbers = #tpu.dot_dimension_numbers<[1], [0], [0], [1], [0, 0, 1, 1], [], []>} : vector<8x512xbf16>, vector<512x128xbf16>, vector<8x128xf32> -> vector<8x128xf32>
    %c0_12 = arith.constant 0 : index
    %c0_13 = arith.constant 0 : index
    %25 = vector.load %arg5[%c0_12, %c0_13] : memref<1x128xf32, #tpu.memory_space<vmem>>, vector<1x128xf32>
    %26 = vector.broadcast %25 : vector<1x128xf32> to vector<8x128xf32>
    %27 = arith.addf %24, %26 : vector<8x128xf32>
    %cst_14 = arith.constant 0.000000e+00 : f32
    %28 = vector.broadcast %cst_14 : f32 to vector<8x128xf32>
    %29 = arith.maximumf %27, %28 : vector<8x128xf32>
    %30 = vector.extract_strided_slice %29 {offsets = [0, 0], sizes = [4, 128], strides = [1, 1]} : vector<8x128xf32> to vector<4x128xf32>
    %31 = vector.extract_strided_slice %29 {offsets = [4, 0], sizes = [4, 128], strides = [1, 1]} : vector<8x128xf32> to vector<4x128xf32>
    %cst_15 = arith.constant 0.000000e+00 : f32
    %32 = vector.broadcast %cst_15 : f32 to vector<2x128xf32>
    %33 = vector.extract_strided_slice %31 {offsets = [0, 0], sizes = [2, 128], strides = [1, 1]} : vector<4x128xf32> to vector<2x128xf32>
    %34 = tpu.concatenate %32, %33 in 0 : vector<2x128xf32>, vector<2x128xf32> -> vector<4x128xf32>
    %cst_16 = arith.constant 0.000000e+00 : f32
    %35 = vector.broadcast %cst_16 : f32 to vector<2x128xf32>
    %36 = vector.extract_strided_slice %30 {offsets = [2, 0], sizes = [2, 128], strides = [1, 1]} : vector<4x128xf32> to vector<2x128xf32>
    %37 = tpu.concatenate %36, %35 in 0 : vector<2x128xf32>, vector<2x128xf32> -> vector<4x128xf32>
    %38 = tpu.concatenate %34, %30, %31, %37 in 1 : vector<4x128xf32>, vector<4x128xf32>, vector<4x128xf32>, vector<4x128xf32> -> vector<4x512xf32>
    %39 = arith.truncf %38 : vector<4x512xf32> to vector<4x512xbf16>
    %c0_17 = arith.constant 0 : index
    %c0_18 = arith.constant 0 : index
    %40 = vector.load %arg6[%c0_17, %c0_18] : memref<512x128xbf16, #tpu.memory_space<vmem>>, vector<512x128xbf16>
    %cst_19 = arith.constant dense<0.000000e+00> : vector<4x128xf32>
    %41 = tpu.matmul %39, %40, %cst_19 {dimension_numbers = #tpu.dot_dimension_numbers<[1], [0], [0], [1], [0, 0, 1, 1], [], []>} : vector<4x512xbf16>, vector<512x128xbf16>, vector<4x128xf32> -> vector<4x128xf32>
    %c0_20 = arith.constant 0 : index
    %c0_21 = arith.constant 0 : index
    %42 = vector.load %arg7[%c0_20, %c0_21] : memref<1x128xf32, #tpu.memory_space<vmem>>, vector<1x128xf32>
    %43 = vector.broadcast %42 : vector<1x128xf32> to vector<4x128xf32>
    %44 = arith.addf %41, %43 : vector<4x128xf32>
    %cst_22 = arith.constant 0.000000e+00 : f32
    %45 = vector.broadcast %cst_22 : f32 to vector<4x128xf32>
    %46 = arith.maximumf %44, %45 : vector<4x128xf32>
    %c0_23 = arith.constant 0 : index
    %c0_24 = arith.constant 0 : index
    %c0_25 = arith.constant 0 : index
    %47 = vector.load %arg8[%c0_23, %c0_24, %c0_25] : memref<1x4x128xf32, #tpu.memory_space<vmem>>, vector<1x4x128xf32>
    %48 = vector.shape_cast %47 : vector<1x4x128xf32> to vector<4x128xf32>
    %49 = vector.shape_cast %46 : vector<4x128xf32> to vector<1x4x128xf32>
    tpu.vector_store %arg8[%c0_23, %c0_24, %c0_25], %49 {strides = array<i32>} : memref<1x4x128xf32, #tpu.memory_space<vmem>>, vector<1x4x128xf32>,
    return
  }
  func.func @transform_0(%arg0: i32) -> (i32, i32, i32) {
    %c0_i32 = arith.constant 0 : i32
    %c0_i32_0 = arith.constant 0 : i32
    %c0_i32_1 = arith.constant 0 : i32
    return %arg0, %c0_i32, %c0_i32_0 : i32, i32, i32
  }
  func.func @transform_1(%arg0: i32) -> (i32, i32) {
    %c0_i32 = arith.constant 0 : i32
    %c0_i32_0 = arith.constant 0 : i32
    %c0_i32_1 = arith.constant 0 : i32
    return %c0_i32, %c0_i32_0 : i32, i32
  }
  func.func @transform_2(%arg0: i32) -> (i32, i32) {
    %c0_i32 = arith.constant 0 : i32
    %c0_i32_0 = arith.constant 0 : i32
    %c0_i32_1 = arith.constant 0 : i32
    return %c0_i32, %c0_i32_0 : i32, i32
  }
  func.func @transform_3(%arg0: i32) -> (i32, i32) {
    %c0_i32 = arith.constant 0 : i32
    %c0_i32_0 = arith.constant 0 : i32
    %c0_i32_1 = arith.constant 0 : i32
    return %c0_i32, %c0_i32_0 : i32, i32
  }
  func.func @transform_4(%arg0: i32) -> (i32, i32) {
    %c0_i32 = arith.constant 0 : i32
    %c0_i32_0 = arith.constant 0 : i32
    %c0_i32_1 = arith.constant 0 : i32
    return %c0_i32, %c0_i32_0 : i32, i32
  }
  func.func @transform_5(%arg0: i32) -> (i32, i32) {
    %c0_i32 = arith.constant 0 : i32
    %c0_i32_0 = arith.constant 0 : i32
    %c0_i32_1 = arith.constant 0 : i32
    return %c0_i32, %c0_i32_0 : i32, i32
  }
  func.func @transform_6(%arg0: i32) -> (i32, i32) {
    %c0_i32 = arith.constant 0 : i32
    %c0_i32_0 = arith.constant 0 : i32
    %c0_i32_1 = arith.constant 0 : i32
    return %c0_i32, %c0_i32_0 : i32, i32
  }
  func.func @transform_7(%arg0: i32) -> (i32, i32, i32) {
    %c0_i32 = arith.constant 0 : i32
    %c0_i32_0 = arith.constant 0 : i32
    %c0_i32_1 = arith.constant 0 : i32
    return %arg0, %c0_i32, %c0_i32_0 : i32, i32, i32
  }
}

</mosaic_0001>

<llo_original>
// kernel: tile.18
$region0: #{tile.18}
  #allocation0 [shape = 's32[1]{0}', space=sflag, size = 0x4, scoped, tag = 'scoped memory for tile.18']
  %s0 = inlined_call_operand.vmem [shape: f32[16], index: 0, kind: input, shape index: {}]
  %s1 = inlined_call_operand.vmem [shape: f32[8,16], index: 1, kind: output, shape index: {}]
  // Predicated region
  $region2: #{tile.18} parent=0 // pred_check
    _
  $region3: #{tile.18} parent=0 // pred_check_branch
    %3 = sbr.rel (0) target = $region5
  $region4: #{tile.18} parent=0 // pred_region
    _
  $region5: #{tile.18} parent=0 // pred_fallthru
    _
  %v4 = vld [vmem:[%s0] ss:$0 sm:$0xff]
  %5 = vst [vmem:[%s1] sm:$0xff] %v4

// kernel: tile.19
$region0: #{tile.19}
  %s0 = inlined_call_operand.vmem [shape: f32[8,16], index: 0, kind: input, shape index: {}]
  %s1 = inlined_call_operand.vmem [shape: f32[1,128], index: 1, kind: output, shape index: {}]
  $region1: #{tile.19} parent=0
    #allocation0 [shape = 'u8[4096]{0}', space=vmem, size = 0x1000, scoped, tag = 'scoped mem for output reshape']
    %v2 = vld [vmem:[%s0] sm:$0x1]
    %vm3 = vcmask 130048
    %4 = vst.msk [vmem:[#allocation0] sm:$0x1] %vm3, %v2
    %s5 = scalar_lea.vmem %s0, 7
    %v6 = vld [vmem:[%s5] sm:$0x1]
    %7 = vrot.lane.b32.xlu0 %v6, 112
    %v8 = vpop.permute.xlu0 %7
    %vm9 = vcmask 1048448
    %10 = vst.msk [vmem:[#allocation0] sm:$0x1] %vm9, %v8
    %s11 = scalar_lea.vmem %s0, 6
    %v12 = vld [vmem:[%s11] sm:$0x1]
    %13 = vrot.lane.b32.xlu0 %v12, 96
    %v14 = vpop.permute.xlu0 %13
    %vm15 = vcmask 917248
    %16 = vst.msk [vmem:[#allocation0] sm:$0x1] %vm15, %v14
    %s17 = scalar_lea.vmem %s0, 5
    %v18 = vld [vmem:[%s17] sm:$0x1]
    %19 = vrot.lane.b32.xlu0 %v18, 80
    %v20 = vpop.permute.xlu0 %19
    %vm21 = vcmask 786048
    %22 = vst.msk [vmem:[#allocation0] sm:$0x1] %vm21, %v20
    %s23 = scalar_lea.vmem %s0, 4
    %v24 = vld [vmem:[%s23] sm:$0x1]
    %25 = vrot.lane.b32.xlu0 %v24, 64
    %v26 = vpop.permute.xlu0 %25
    %vm27 = vcmask 654848
    %28 = vst.msk [vmem:[#allocation0] sm:$0x1] %vm27, %v26
    %s29 = scalar_lea.vmem %s0, 3
    %v30 = vld [vmem:[%s29] sm:$0x1]
    %31 = vrot.lane.b32.xlu0 %v30, 48
    %v32 = vpop.permute.xlu0 %31
    %vm33 = vcmask 523648
    %34 = vst.msk [vmem:[#allocation0] sm:$0x1] %vm33, %v32
    %s35 = scalar_lea.vmem %s0, 2
    %v36 = vld [vmem:[%s35] sm:$0x1]
    %37 = vrot.lane.b32.xlu0 %v36, 32
    %v38 = vpop.permute.xlu0 %37
    %vm39 = vcmask 392448
    %40 = vst.msk [vmem:[#allocation0] sm:$0x1] %vm39, %v38
    %s41 = scalar_lea.vmem %s0, 1
    %v42 = vld [vmem:[%s41] sm:$0x1]
    %43 = vrot.lane.b32.xlu0 %v42, 16
    %v44 = vpop.permute.xlu0 %43
    %vm45 = vcmask 261248
    %46 = vst.msk [vmem:[#allocation0] sm:$0x1] %vm45, %v44
    %s48 = ssub.s32 2, 1
    %v49 = vld [vmem:[#allocation0] sm:%s48]
    %s51 = ssub.s32 2, 1
    %52 = vst [vmem:[%s1] sm:%s51] %v49

// kernel: tile.24
$region0: #{tile.24}
  %s0 = inlined_call_operand.vmem [shape: f32[4,32], index: 0, kind: input, shape index: {}]
  %s1 = inlined_call_operand.vmem [shape: f32[1,128], index: 1, kind: output, shape index: {}]
  $region1: #{tile.24} parent=0
    #allocation0 [shape = 'u8[4096]{0}', space=vmem, size = 0x1000, scoped, tag = 'scoped mem for output reshape']
    #allocation1 [shape = 'u8[4096]{0}', space=vmem, size = 0x1000, scoped, tag = 'scoped mem for input reshape']
    %s3 = ssub.s32 16, 1
    %v4 = vld [vmem:[%s0] sm:%s3]
    %5 = vst [vmem:[#allocation1] sm:%s3] %v4
    %v6 = vld [vmem:[#allocation1] sm:$0x1]
    %vm7 = vcmask 261120
    %8 = vst.msk [vmem:[#allocation0] sm:$0x1] %vm7, %v6
    %s9 = scalar_lea.vmem [#allocation1], 3
    %v10 = vld [vmem:[%s9] sm:$0x1]
    %11 = vrot.lane.b32.xlu0 %v10, 96
    %v12 = vpop.permute.xlu0 %11
    %vm13 = vcmask 1048320
    %14 = vst.msk [vmem:[#allocation0] sm:$0x1] %vm13, %v12
    %s15 = scalar_lea.vmem [#allocation1], 2
    %v16 = vld [vmem:[%s15] sm:$0x1]
    %17 = vrot.lane.b32.xlu0 %v16, 64
    %v18 = vpop.permute.xlu0 %17
    %vm19 = vcmask 785920
    %20 = vst.msk [vmem:[#allocation0] sm:$0x1] %vm19, %v18
    %s21 = scalar_lea.vmem [#allocation1], 1
    %v22 = vld [vmem:[%s21] sm:$0x1]
    %23 = vrot.lane.b32.xlu0 %v22, 32
    %v24 = vpop.permute.xlu0 %23
    %vm25 = vcmask 523520
    %26 = vst.msk [vmem:[#allocation0] sm:$0x1] %vm25, %v24
    %s28 = ssub.s32 2, 1
    %v29 = vld [vmem:[#allocation0] sm:%s28]
    %s31 = ssub.s32 2, 1
    %32 = vst [vmem:[%s1] sm:%s31] %v29

// kernel: tile.23
$region0: #{tile.23}
  #allocation0 [shape = 's32[1]{0}', space=sflag, size = 0x4, scoped, tag = 'scoped memory for tile.23']
  %s0 = inlined_call_operand.vmem [shape: f32[32], index: 0, kind: input, shape index: {}]
  %s1 = inlined_call_operand.vmem [shape: f32[4,32], index: 1, kind: output, shape index: {}]
  // Predicated region
  $region2: #{tile.23} parent=0 // pred_check
    _
  $region3: #{tile.23} parent=0 // pred_check_branch
    %3 = sbr.rel (0) target = $region5
  $region4: #{tile.23} parent=0 // pred_region
    _
  $region5: #{tile.23} parent=0 // pred_fallthru
    _
  %v4 = vld [vmem:[%s0] ss:$0 sm:$0xff]
  %5 = vst [vmem:[%s1] sm:$0xf] %v4

// kernel: tile.28
$region0: #{tile.28}
  #allocation0 [shape = 's32[1]{0}', space=sflag, size = 0x4, scoped, tag = 'scoped memory for tile.28']
  %s0 = inlined_call_operand.vmem [shape: f32[64], index: 0, kind: input, shape index: {}]
  %s1 = inlined_call_operand.vmem [shape: f32[2,64], index: 1, kind: output, shape index: {}]
  // Predicated region
  $region2: #{tile.28} parent=0 // pred_check
    _
  $region3: #{tile.28} parent=0 // pred_check_branch
    %3 = sbr.rel (0) target = $region5
  $region4: #{tile.28} parent=0 // pred_region
    _
  $region5: #{tile.28} parent=0 // pred_fallthru
    _
  %v4 = vld [vmem:[%s0] ss:$0 sm:$0xff]
  %5 = vst [vmem:[%s1] sm:$0x3] %v4

// kernel: tile.29
$region0: #{tile.29}
  %s0 = inlined_call_operand.vmem [shape: f32[2,64], index: 0, kind: input, shape index: {}]
  %s1 = inlined_call_operand.vmem [shape: f32[1,128], index: 1, kind: output, shape index: {}]
  $region1: #{tile.29} parent=0
    #allocation0 [shape = 'u8[4096]{0}', space=vmem, size = 0x1000, scoped, tag = 'scoped mem for output reshape']
    #allocation1 [shape = 'u8[4096]{0}', space=vmem, size = 0x1000, scoped, tag = 'scoped mem for input reshape']
    %s3 = ssub.s32 4, 1
    %v4 = vld [vmem:[%s0] sm:%s3]
    %5 = vst [vmem:[#allocation1] sm:%s3] %v4
    %v6 = vld [vmem:[#allocation1] sm:$0x1]
    %vm7 = vcmask 523264
    %8 = vst.msk [vmem:[#allocation0] sm:$0x1] %vm7, %v6
    %s9 = scalar_lea.vmem [#allocation1], 1
    %v10 = vld [vmem:[%s9] sm:$0x1]
    %11 = vrot.lane.b32.xlu0 %v10, 64
    %v12 = vpop.permute.xlu0 %11
    %vm13 = vcmask 1048064
    %14 = vst.msk [vmem:[#allocation0] sm:$0x1] %vm13, %v12
    %s16 = ssub.s32 2, 1
    %v17 = vld [vmem:[#allocation0] sm:%s16]
    %s19 = ssub.s32 2, 1
    %20 = vst [vmem:[%s1] sm:%s19] %v17

// kernel: vae_encoder_forward.1
$region0: #{vae_encoder_forward.1}
  #allocation0 [shape = 'u32[]', space=smem, size = 0x4, offset = 0x4, fixed_abs, tag = 'smem constant byte address 0x4 - core index']
  #allocation1 [shape = 'u32[72,128]{1,0:T(1,128)}', space=vmem, size = 0x9000, scoped, tag = 'internal scratch']
  %s0 = inlined_call_operand.vmem [shape: bf16[1,16,512], index: 0, kind: input, shape index: {}]
  %s1 = inlined_call_operand.vmem [shape: bf16[512,128], index: 1, kind: input, shape index: {}]
  %s2 = inlined_call_operand.vmem [shape: f32[1,128], index: 2, kind: input, shape index: {}]
  %s3 = inlined_call_operand.vmem [shape: bf16[512,128], index: 3, kind: input, shape index: {}]
  %s4 = inlined_call_operand.vmem [shape: f32[1,128], index: 4, kind: input, shape index: {}]
  %s5 = inlined_call_operand.vmem [shape: bf16[512,128], index: 5, kind: input, shape index: {}]
  %s6 = inlined_call_operand.vmem [shape: f32[1,128], index: 6, kind: input, shape index: {}]
  %s7 = inlined_call_operand.vmem [shape: f32[1,4,128], index: 7, kind: output, shape index: {}]
  %s8 = sld [smem:[#allocation0]]
  $region38: #{vae_encoder_forward.1} parent=0
    _
  %s10 = ssub.s32 1, %s8
  %s11 = scalar_select 0, %s10, %s8
  // Predicated region
  $region2: #{vae_encoder_forward.1} parent=0 // pred_check
    _
  $region3: #{vae_encoder_forward.1} parent=0 // pred_check_branch
    %13 = sbr.rel (0) target = $region5
  $region4: #{vae_encoder_forward.1} parent=0 // pred_region
    _
  $region5: #{vae_encoder_forward.1} parent=0 // pred_fallthru
    _
  // Predicated region
  $region6: #{vae_encoder_forward.1} parent=0 // pred_check
    _
  $region7: #{vae_encoder_forward.1} parent=0 // pred_check_branch
    %15 = sbr.rel (0) target = $region9
  $region8: #{vae_encoder_forward.1} parent=0 // pred_region
    _
  $region9: #{vae_encoder_forward.1} parent=0 // pred_fallthru
    _
  // Predicated region
  $region10: #{vae_encoder_forward.1} parent=0 // pred_check
    _
  $region11: #{vae_encoder_forward.1} parent=0 // pred_check_branch
    %17 = sbr.rel (0) target = $region13
  $region12: #{vae_encoder_forward.1} parent=0 // pred_region
    _
  $region13: #{vae_encoder_forward.1} parent=0 // pred_fallthru
    _
  // Predicated region
  $region14: #{vae_encoder_forward.1} parent=0 // pred_check
    _
  $region15: #{vae_encoder_forward.1} parent=0 // pred_check_branch
    %19 = sbr.rel (0) target = $region17
  $region16: #{vae_encoder_forward.1} parent=0 // pred_region
    _
  $region17: #{vae_encoder_forward.1} parent=0 // pred_fallthru
    _
  // Predicated region
  $region18: #{vae_encoder_forward.1} parent=0 // pred_check
    _
  $region19: #{vae_encoder_forward.1} parent=0 // pred_check_branch
    %21 = sbr.rel (0) target = $region21
  $region20: #{vae_encoder_forward.1} parent=0 // pred_region
    _
  $region21: #{vae_encoder_forward.1} parent=0 // pred_fallthru
    _
  // Predicated region
  $region22: #{vae_encoder_forward.1} parent=0 // pred_check
    _
  $region23: #{vae_encoder_forward.1} parent=0 // pred_check_branch
    %23 = sbr.rel (0) target = $region25
  $region24: #{vae_encoder_forward.1} parent=0 // pred_region
    _
  $region25: #{vae_encoder_forward.1} parent=0 // pred_fallthru
    _
  // Predicated region
  $region26: #{vae_encoder_forward.1} parent=0 // pred_check
    _
  $region27: #{vae_encoder_forward.1} parent=0 // pred_check_branch
    %25 = sbr.rel (0) target = $region29
  $region28: #{vae_encoder_forward.1} parent=0 // pred_region
    _
  $region29: #{vae_encoder_forward.1} parent=0 // pred_fallthru
    _
  %v26 = vld [vmem:[%s0] sm:$0xff]
  %v27 = vld [vmem:[%s0 + $0x8] sm:$0xff]
  %v28 = vld [vmem:[%s0 + $0x10] sm:$0xff]
  %v29 = vld [vmem:[%s0 + $0x18] sm:$0xff]
  %v30 = vld [vmem:[%s1] sm:$0xf]
  %v31 = vld [vmem:[%s1 + $0x4] sm:$0xf]
  %v32 = vld [vmem:[%s1 + $0x8] sm:$0xf]
  %v33 = vld [vmem:[%s1 + $0xc] sm:$0xf]
  %v34 = vld [vmem:[%s1 + $0x10] sm:$0xf]
  %v35 = vld [vmem:[%s1 + $0x14] sm:$0xf]
  %v36 = vld [vmem:[%s1 + $0x18] sm:$0xf]
  %v37 = vld [vmem:[%s1 + $0x1c] sm:$0xf]
  %v38 = vld [vmem:[%s1 + $0x20] sm:$0xf]
  %v39 = vld [vmem:[%s1 + $0x24] sm:$0xf]
  %v40 = vld [vmem:[%s1 + $0x28] sm:$0xf]
  %v41 = vld [vmem:[%s1 + $0x2c] sm:$0xf]
  %v42 = vld [vmem:[%s1 + $0x30] sm:$0xf]
  %v43 = vld [vmem:[%s1 + $0x34] sm:$0xf]
  %v44 = vld [vmem:[%s1 + $0x38] sm:$0xf]
  %v45 = vld [vmem:[%s1 + $0x3c] sm:$0xf]
  %v46 = vld [vmem:[%s1 + $0x40] sm:$0xf]
  %v47 = vld [vmem:[%s1 + $0x44] sm:$0xf]
  %v48 = vld [vmem:[%s1 + $0x48] sm:$0xf]
  %v49 = vld [vmem:[%s1 + $0x4c] sm:$0xf]
  %v50 = vld [vmem:[%s1 + $0x50] sm:$0xf]
  %v51 = vld [vmem:[%s1 + $0x54] sm:$0xf]
  %v52 = vld [vmem:[%s1 + $0x58] sm:$0xf]
  %v53 = vld [vmem:[%s1 + $0x5c] sm:$0xf]
  %v54 = vld [vmem:[%s1 + $0x60] sm:$0xf]
  %v55 = vld [vmem:[%s1 + $0x64] sm:$0xf]
  %v56 = vld [vmem:[%s1 + $0x68] sm:$0xf]
  %v57 = vld [vmem:[%s1 + $0x6c] sm:$0xf]
  %v58 = vld [vmem:[%s1 + $0x70] sm:$0xf]
  %v59 = vld [vmem:[%s1 + $0x74] sm:$0xf]
  %v60 = vld [vmem:[%s1 + $0x78] sm:$0xf]
  %v61 = vld [vmem:[%s1 + $0x7c] sm:$0xf]
  %v62 = vld [vmem:[%s1 + $0x80] sm:$0xf]
  %v63 = vld [vmem:[%s1 + $0x84] sm:$0xf]
  %v64 = vld [vmem:[%s1 + $0x88] sm:$0xf]
  %v65 = vld [vmem:[%s1 + $0x8c] sm:$0xf]
  %v66 = vld [vmem:[%s1 + $0x90] sm:$0xf]
  %v67 = vld [vmem:[%s1 + $0x94] sm:$0xf]
  %v68 = vld [vmem:[%s1 + $0x98] sm:$0xf]
  %v69 = vld [vmem:[%s1 + $0x9c] sm:$0xf]
  %v70 = vld [vmem:[%s1 + $0xa0] sm:$0xf]
  %v71 = vld [vmem:[%s1 + $0xa4] sm:$0xf]
  %v72 = vld [vmem:[%s1 + $0xa8] sm:$0xf]
  %v73 = vld [vmem:[%s1 + $0xac] sm:$0xf]
  %v74 = vld [vmem:[%s1 + $0xb0] sm:$0xf]
  %v75 = vld [vmem:[%s1 + $0xb4] sm:$0xf]
  %v76 = vld [vmem:[%s1 + $0xb8] sm:$0xf]
  %v77 = vld [vmem:[%s1 + $0xbc] sm:$0xf]
  %v78 = vld [vmem:[%s1 + $0xc0] sm:$0xf]
  %v79 = vld [vmem:[%s1 + $0xc4] sm:$0xf]
  %v80 = vld [vmem:[%s1 + $0xc8] sm:$0xf]
  %v81 = vld [vmem:[%s1 + $0xcc] sm:$0xf]
  %v82 = vld [vmem:[%s1 + $0xd0] sm:$0xf]
  %v83 = vld [vmem:[%s1 + $0xd4] sm:$0xf]
  %v84 = vld [vmem:[%s1 + $0xd8] sm:$0xf]
  %v85 = vld [vmem:[%s1 + $0xdc] sm:$0xf]
  %v86 = vld [vmem:[%s1 + $0xe0] sm:$0xf]
  %v87 = vld [vmem:[%s1 + $0xe4] sm:$0xf]
  %v88 = vld [vmem:[%s1 + $0xe8] sm:$0xf]
  %v89 = vld [vmem:[%s1 + $0xec] sm:$0xf]
  %v90 = vld [vmem:[%s1 + $0xf0] sm:$0xf]
  %v91 = vld [vmem:[%s1 + $0xf4] sm:$0xf]
  %v92 = vld [vmem:[%s1 + $0xf8] sm:$0xf]
  %v93 = vld [vmem:[%s1 + $0xfc] sm:$0xf]
  %v94 = vld [vmem:[%s2] sm:$0x1]
  %v96 = vperm.slane %v94, 0
  %v102 = vunpack.c.l.b16 %v26
  %v103 = vunpack.c.h.b16 %v26
  %v104 = vunpack.c.l.b16 %v27
  %v105 = vunpack.c.h.b16 %v27
  %v106 = vunpack.c.l.b16 %v28
  %v107 = vunpack.c.h.b16 %v28
  %v108 = vunpack.c.l.b16 %v29
  %v109 = vunpack.c.h.b16 %v29
  %v110 = vpack.c.b16 %v106, %v102
  %v111 = vpack.c.b16 %v107, %v103
  %v112 = vpack.c.b16 %v108, %v104
  %v113 = vpack.c.b16 %v109, %v105
  %v182 = vunpack.c.l.b16 %v30
  %v183 = vunpack.c.l.b16 %v31
  %v184 = vunpack.c.l.b16 %v32
  %v185 = vunpack.c.l.b16 %v33
  %v186 = vunpack.c.l.b16 %v34
  %v187 = vunpack.c.l.b16 %v35
  %v188 = vunpack.c.l.b16 %v36
  %v189 = vunpack.c.l.b16 %v37
  %v190 = vunpack.c.l.b16 %v38
  %v191 = vunpack.c.l.b16 %v39
  %v192 = vunpack.c.l.b16 %v40
  %v193 = vunpack.c.l.b16 %v41
  %v194 = vunpack.c.l.b16 %v42
  %v195 = vunpack.c.l.b16 %v43
  %v196 = vunpack.c.l.b16 %v44
  %v197 = vunpack.c.l.b16 %v45
  %v198 = vunpack.c.l.b16 %v46
  %v199 = vunpack.c.l.b16 %v47
  %v200 = vunpack.c.l.b16 %v48
  %v201 = vunpack.c.l.b16 %v49
  %v202 = vunpack.c.l.b16 %v50
  %v203 = vunpack.c.l.b16 %v51
  %v204 = vunpack.c.l.b16 %v52
  %v205 = vunpack.c.l.b16 %v53
  %v206 = vunpack.c.l.b16 %v54
  %v207 = vunpack.c.l.b16 %v55
  %v208 = vunpack.c.l.b16 %v56
  %v209 = vunpack.c.l.b16 %v57
  %v210 = vunpack.c.l.b16 %v58
  %v211 = vunpack.c.l.b16 %v59
  %v212 = vunpack.c.l.b16 %v60
  %v213 = vunpack.c.l.b16 %v61
  %v214 = vunpack.c.l.b16 %v62
  %v215 = vunpack.c.l.b16 %v63
  %v216 = vunpack.c.l.b16 %v64
  %v217 = vunpack.c.l.b16 %v65
  %v218 = vunpack.c.l.b16 %v66
  %v219 = vunpack.c.l.b16 %v67
  %v220 = vunpack.c.l.b16 %v68
  %v221 = vunpack.c.l.b16 %v69
  %v222 = vunpack.c.l.b16 %v70
  %v223 = vunpack.c.l.b16 %v71
  %v224 = vunpack.c.l.b16 %v72
  %v225 = vunpack.c.l.b16 %v73
  %v226 = vunpack.c.l.b16 %v74
  %v227 = vunpack.c.l.b16 %v75
  %v228 = vunpack.c.l.b16 %v76
  %v229 = vunpack.c.l.b16 %v77
  %v230 = vunpack.c.l.b16 %v78
  %v231 = vunpack.c.l.b16 %v79
  %v232 = vunpack.c.l.b16 %v80
  %v233 = vunpack.c.l.b16 %v81
  %v234 = vunpack.c.l.b16 %v82
  %v235 = vunpack.c.l.b16 %v83
  %v236 = vunpack.c.l.b16 %v84
  %v237 = vunpack.c.l.b16 %v85
  %v238 = vunpack.c.l.b16 %v86
  %v239 = vunpack.c.l.b16 %v87
  %v240 = vunpack.c.l.b16 %v88
  %v241 = vunpack.c.l.b16 %v89
  %v242 = vunpack.c.l.b16 %v90
  %v243 = vunpack.c.l.b16 %v91
  %v244 = vunpack.c.l.b16 %v92
  %v245 = vunpack.c.l.b16 %v93
  %v246 = vpack.c.b16 %v183, %v182
  %v247 = vpack.c.b16 %v185, %v184
  %v248 = vpack.c.b16 %v187, %v186
  %v249 = vpack.c.b16 %v189, %v188
  %v250 = vpack.c.b16 %v191, %v190
  %v251 = vpack.c.b16 %v193, %v192
  %v252 = vpack.c.b16 %v195, %v194
  %v253 = vpack.c.b16 %v197, %v196
  %v254 = vpack.c.b16 %v199, %v198
  %v255 = vpack.c.b16 %v201, %v200
  %v256 = vpack.c.b16 %v203, %v202
  %v257 = vpack.c.b16 %v205, %v204
  %v258 = vpack.c.b16 %v207, %v206
  %v259 = vpack.c.b16 %v209, %v208
  %v260 = vpack.c.b16 %v211, %v210
  %v261 = vpack.c.b16 %v213, %v212
  %v262 = vpack.c.b16 %v215, %v214
  %v263 = vpack.c.b16 %v217, %v216
  %v264 = vpack.c.b16 %v219, %v218
  %v265 = vpack.c.b16 %v221, %v220
  %v266 = vpack.c.b16 %v223, %v222
  %v267 = vpack.c.b16 %v225, %v224
  %v268 = vpack.c.b16 %v227, %v226
  %v269 = vpack.c.b16 %v229, %v228
  %v270 = vpack.c.b16 %v231, %v230
  %v271 = vpack.c.b16 %v233, %v232
  %v272 = vpack.c.b16 %v235, %v234
  %v273 = vpack.c.b16 %v237, %v236
  %v274 = vpack.c.b16 %v239, %v238
  %v275 = vpack.c.b16 %v241, %v240
  %v276 = vpack.c.b16 %v243, %v242
  %v277 = vpack.c.b16 %v245, %v244
  %310 = vmatpush.bf16.msra.mxu0 %v253
  %311 = vmatpush.bf16.msra.mxu0 %v252
  %312 = vmatpush.bf16.msra.mxu0 %v251
  %313 = vmatpush.bf16.msra.mxu0 %v250
  %314 = vmatpush.bf16.msra.mxu0 %v249
  %315 = vmatpush.bf16.msra.mxu0 %v248
  %316 = vmatpush.bf16.msra.mxu0 %v247
  %317 = vmatpush.bf16.msra.mxu0 %v246
  %318 = vmatmul.bf16.gmra.mxu0 %v110
  %v319 = vpop.f32.mrf.mxu0
  %v320 = vadd.f32 %v96, %v319
  %v321 = vpop.f32.mrf.mxu0
  %v322 = vadd.f32 %v96, %v321
  %323 = vdwg.mxu0
  %324 = vmatpush.bf16.msra.mxu0 %v261
  %325 = vmatpush.bf16.msra.mxu0 %v260
  %326 = vmatpush.bf16.msra.mxu0 %v259
  %327 = vmatpush.bf16.msra.mxu0 %v258
  %328 = vmatpush.bf16.msra.mxu0 %v257
  %329 = vmatpush.bf16.msra.mxu0 %v256
  %330 = vmatpush.bf16.msra.mxu0 %v255
  %331 = vmatpush.bf16.msra.mxu0 %v254
  %332 = vmatmul.bf16.gmra.mxu0 %v111
  %v333 = vpop.f32.mrf.mxu0
  %v334 = vadd.f32 %v320, %v333
  %v335 = vpop.f32.mrf.mxu0
  %v336 = vadd.f32 %v322, %v335
  %337 = vdwg.mxu0
  %338 = vmatpush.bf16.msra.mxu0 %v269
  %339 = vmatpush.bf16.msra.mxu0 %v268
  %340 = vmatpush.bf16.msra.mxu0 %v267
  %341 = vmatpush.bf16.msra.mxu0 %v266
  %342 = vmatpush.bf16.msra.mxu0 %v265
  %343 = vmatpush.bf16.msra.mxu0 %v264
  %344 = vmatpush.bf16.msra.mxu0 %v263
  %345 = vmatpush.bf16.msra.mxu0 %v262
  %346 = vmatmul.bf16.gmra.mxu0 %v112
  %v347 = vpop.f32.mrf.mxu0
  %v348 = vadd.f32 %v334, %v347
  %v349 = vpop.f32.mrf.mxu0
  %v350 = vadd.f32 %v336, %v349
  %351 = vdwg.mxu0
  %352 = vmatpush.bf16.msra.mxu0 %v277
  %353 = vmatpush.bf16.msra.mxu0 %v276
  %354 = vmatpush.bf16.msra.mxu0 %v275
  %355 = vmatpush.bf16.msra.mxu0 %v274
  %356 = vmatpush.bf16.msra.mxu0 %v273
  %357 = vmatpush.bf16.msra.mxu0 %v272
  %358 = vmatpush.bf16.msra.mxu0 %v271
  %359 = vmatpush.bf16.msra.mxu0 %v270
  %360 = vmatmul.bf16.gmra.mxu0 %v113
  %v361 = vpop.f32.mrf.mxu0
  %v362 = vadd.f32 %v348, %v361
  %v363 = vpop.f32.mrf.mxu0
  %v364 = vadd.f32 %v350, %v363
  %365 = vdwg.mxu0
  %v366 = vmax.f32 %v362, 0.0
  %v367 = vmax.f32 %v364, 0.0
  %v369 = vrot.slane %v367, 2
  %vm371 = vcmask 1041408
  %v372 = vsel %vm371, 0.0, %v369
  %v374 = vrot.slane %v366, 4
  %v376 = vrot.slane %v366, 2
  %v378 = vsel %vm371, %v376, 0.0
  %v379 = vrot.slane %v367, 4
  %v382 = vrot.slane %v378, 4
  %vm384 = vcmask 1043456
  %v385 = vsel %vm384, %v372, %v366
  %v386 = vsel %vm384, %v366, %v379
  %v387 = vsel %vm384, %v374, %v367
  %v388 = vsel %vm384, %v367, %v382
  %v389 = vpack.c.bf16 %v385, %v385
  %v390 = vpack.c.bf16 %v386, %v386
  %v391 = vpack.c.bf16 %v387, %v387
  %v392 = vpack.c.bf16 %v388, %v388
  %v393 = vld [vmem:[%s3] sm:$0xf]
  %v394 = vld [vmem:[%s3 + $0x4] sm:$0xf]
  %v395 = vld [vmem:[%s3 + $0x8] sm:$0xf]
  %v396 = vld [vmem:[%s3 + $0xc] sm:$0xf]
  %v397 = vld [vmem:[%s3 + $0x10] sm:$0xf]
  %v398 = vld [vmem:[%s3 + $0x14] sm:$0xf]
  %v399 = vld [vmem:[%s3 + $0x18] sm:$0xf]
  %v400 = vld [vmem:[%s3 + $0x1c] sm:$0xf]
  %v401 = vld [vmem:[%s3 + $0x20] sm:$0xf]
  %v402 = vld [vmem:[%s3 + $0x24] sm:$0xf]
  %v403 = vld [vmem:[%s3 + $0x28] sm:$0xf]
  %v404 = vld [vmem:[%s3 + $0x2c] sm:$0xf]
  %v405 = vld [vmem:[%s3 + $0x30] sm:$0xf]
  %v406 = vld [vmem:[%s3 + $0x34] sm:$0xf]
  %v407 = vld [vmem:[%s3 + $0x38] sm:$0xf]
  %v408 = vld [vmem:[%s3 + $0x3c] sm:$0xf]
  %v409 = vld [vmem:[%s3 + $0x40] sm:$0xf]
  %v410 = vld [vmem:[%s3 + $0x44] sm:$0xf]
  %v411 = vld [vmem:[%s3 + $0x48] sm:$0xf]
  %v412 = vld [vmem:[%s3 + $0x4c] sm:$0xf]
  %v413 = vld [vmem:[%s3 + $0x50] sm:$0xf]
  %v414 = vld [vmem:[%s3 + $0x54] sm:$0xf]
  %v415 = vld [vmem:[%s3 + $0x58] sm:$0xf]
  %v416 = vld [vmem:[%s3 + $0x5c] sm:$0xf]
  %v417 = vld [vmem:[%s3 + $0x60] sm:$0xf]
  %v418 = vld [vmem:[%s3 + $0x64] sm:$0xf]
  %v419 = vld [vmem:[%s3 + $0x68] sm:$0xf]
  %v420 = vld [vmem:[%s3 + $0x6c] sm:$0xf]
  %v421 = vld [vmem:[%s3 + $0x70] sm:$0xf]
  %v422 = vld [vmem:[%s3 + $0x74] sm:$0xf]
  %v423 = vld [vmem:[%s3 + $0x78] sm:$0xf]
  %v424 = vld [vmem:[%s3 + $0x7c] sm:$0xf]
  %v425 = vld [vmem:[%s3 + $0x80] sm:$0xf]
  %v426 = vld [vmem:[%s3 + $0x84] sm:$0xf]
  %v427 = vld [vmem:[%s3 + $0x88] sm:$0xf]
  %v428 = vld [vmem:[%s3 + $0x8c] sm:$0xf]
  %v429 = vld [vmem:[%s3 + $0x90] sm:$0xf]
  %v430 = vld [vmem:[%s3 + $0x94] sm:$0xf]
  %v431 = vld [vmem:[%s3 + $0x98] sm:$0xf]
  %v432 = vld [vmem:[%s3 + $0x9c] sm:$0xf]
  %v433 = vld [vmem:[%s3 + $0xa0] sm:$0xf]
  %v434 = vld [vmem:[%s3 + $0xa4] sm:$0xf]
  %v435 = vld [vmem:[%s3 + $0xa8] sm:$0xf]
  %v436 = vld [vmem:[%s3 + $0xac] sm:$0xf]
  %v437 = vld [vmem:[%s3 + $0xb0] sm:$0xf]
  %v438 = vld [vmem:[%s3 + $0xb4] sm:$0xf]
  %v439 = vld [vmem:[%s3 + $0xb8] sm:$0xf]
  %v440 = vld [vmem:[%s3 + $0xbc] sm:$0xf]
  %v441 = vld [vmem:[%s3 + $0xc0] sm:$0xf]
  %v442 = vld [vmem:[%s3 + $0xc4] sm:$0xf]
  %v443 = vld [vmem:[%s3 + $0xc8] sm:$0xf]
  %v444 = vld [vmem:[%s3 + $0xcc] sm:$0xf]
  %v445 = vld [vmem:[%s3 + $0xd0] sm:$0xf]
  %v446 = vld [vmem:[%s3 + $0xd4] sm:$0xf]
  %v447 = vld [vmem:[%s3 + $0xd8] sm:$0xf]
  %v448 = vld [vmem:[%s3 + $0xdc] sm:$0xf]
  %v449 = vld [vmem:[%s3 + $0xe0] sm:$0xf]
  %v450 = vld [vmem:[%s3 + $0xe4] sm:$0xf]
  %v451 = vld [vmem:[%s3 + $0xe8] sm:$0xf]
  %v452 = vld [vmem:[%s3 + $0xec] sm:$0xf]
  %v453 = vld [vmem:[%s3 + $0xf0] sm:$0xf]
  %v454 = vld [vmem:[%s3 + $0xf4] sm:$0xf]
  %v455 = vld [vmem:[%s3 + $0xf8] sm:$0xf]
  %v456 = vld [vmem:[%s3 + $0xfc] sm:$0xf]
  %v457 = vld [vmem:[%s4] sm:$0x1]
  %v459 = vperm.slane %v457, 0
  %v525 = vunpack.c.l.b16 %v393
  %v526 = vunpack.c.l.b16 %v394
  %v527 = vunpack.c.l.b16 %v395
  %v528 = vunpack.c.l.b16 %v396
  %v529 = vunpack.c.l.b16 %v397
  %v530 = vunpack.c.l.b16 %v398
  %v531 = vunpack.c.l.b16 %v399
  %v532 = vunpack.c.l.b16 %v400
  %v533 = vunpack.c.l.b16 %v401
  %v534 = vunpack.c.l.b16 %v402
  %v535 = vunpack.c.l.b16 %v403
  %v536 = vunpack.c.l.b16 %v404
  %v537 = vunpack.c.l.b16 %v405
  %v538 = vunpack.c.l.b16 %v406
  %v539 = vunpack.c.l.b16 %v407
  %v540 = vunpack.c.l.b16 %v408
  %v541 = vunpack.c.l.b16 %v409
  %v542 = vunpack.c.l.b16 %v410
  %v543 = vunpack.c.l.b16 %v411
  %v544 = vunpack.c.l.b16 %v412
  %v545 = vunpack.c.l.b16 %v413
  %v546 = vunpack.c.l.b16 %v414
  %v547 = vunpack.c.l.b16 %v415
  %v548 = vunpack.c.l.b16 %v416
  %v549 = vunpack.c.l.b16 %v417
  %v550 = vunpack.c.l.b16 %v418
  %v551 = vunpack.c.l.b16 %v419
  %v552 = vunpack.c.l.b16 %v420
  %v553 = vunpack.c.l.b16 %v421
  %v554 = vunpack.c.l.b16 %v422
  %v555 = vunpack.c.l.b16 %v423
  %v556 = vunpack.c.l.b16 %v424
  %v557 = vunpack.c.l.b16 %v425
  %v558 = vunpack.c.l.b16 %v426
  %v559 = vunpack.c.l.b16 %v427
  %v560 = vunpack.c.l.b16 %v428
  %v561 = vunpack.c.l.b16 %v429
  %v562 = vunpack.c.l.b16 %v430
  %v563 = vunpack.c.l.b16 %v431
  %v564 = vunpack.c.l.b16 %v432
  %v565 = vunpack.c.l.b16 %v433
  %v566 = vunpack.c.l.b16 %v434
  %v567 = vunpack.c.l.b16 %v435
  %v568 = vunpack.c.l.b16 %v436
  %v569 = vunpack.c.l.b16 %v437
  %v570 = vunpack.c.l.b16 %v438
  %v571 = vunpack.c.l.b16 %v439
  %v572 = vunpack.c.l.b16 %v440
  %v573 = vunpack.c.l.b16 %v441
  %v574 = vunpack.c.l.b16 %v442
  %v575 = vunpack.c.l.b16 %v443
  %v576 = vunpack.c.l.b16 %v444
  %v577 = vunpack.c.l.b16 %v445
  %v578 = vunpack.c.l.b16 %v446
  %v579 = vunpack.c.l.b16 %v447
  %v580 = vunpack.c.l.b16 %v448
  %v581 = vunpack.c.l.b16 %v449
  %v582 = vunpack.c.l.b16 %v450
  %v583 = vunpack.c.l.b16 %v451
  %v584 = vunpack.c.l.b16 %v452
  %v585 = vunpack.c.l.b16 %v453
  %v586 = vunpack.c.l.b16 %v454
  %v587 = vunpack.c.l.b16 %v455
  %v588 = vunpack.c.l.b16 %v456
  %v589 = vpack.c.b16 %v526, %v525
  %v590 = vpack.c.b16 %v528, %v527
  %v591 = vpack.c.b16 %v530, %v529
  %v592 = vpack.c.b16 %v532, %v531
  %v593 = vpack.c.b16 %v534, %v533
  %v594 = vpack.c.b16 %v536, %v535
  %v595 = vpack.c.b16 %v538, %v537
  %v596 = vpack.c.b16 %v540, %v539
  %v597 = vpack.c.b16 %v542, %v541
  %v598 = vpack.c.b16 %v544, %v543
  %v599 = vpack.c.b16 %v546, %v545
  %v600 = vpack.c.b16 %v548, %v547
  %v601 = vpack.c.b16 %v550, %v549
  %v602 = vpack.c.b16 %v552, %v551
  %v603 = vpack.c.b16 %v554, %v553
  %v604 = vpack.c.b16 %v556, %v555
  %v605 = vpack.c.b16 %v558, %v557
  %v606 = vpack.c.b16 %v560, %v559
  %v607 = vpack.c.b16 %v562, %v561
  %v608 = vpack.c.b16 %v564, %v563
  %v609 = vpack.c.b16 %v566, %v565
  %v610 = vpack.c.b16 %v568, %v567
  %v611 = vpack.c.b16 %v570, %v569
  %v612 = vpack.c.b16 %v572, %v571
  %v613 = vpack.c.b16 %v574, %v573
  %v614 = vpack.c.b16 %v576, %v575
  %v615 = vpack.c.b16 %v578, %v577
  %v616 = vpack.c.b16 %v580, %v579
  %v617 = vpack.c.b16 %v582, %v581
  %v618 = vpack.c.b16 %v584, %v583
  %v619 = vpack.c.b16 %v586, %v585
  %v620 = vpack.c.b16 %v588, %v587
  %653 = vmatpush.bf16.msra.mxu0 %v596
  %654 = vmatpush.bf16.msra.mxu0 %v595
  %655 = vmatpush.bf16.msra.mxu0 %v594
  %656 = vmatpush.bf16.msra.mxu0 %v593
  %657 = vmatpush.bf16.msra.mxu0 %v592
  %658 = vmatpush.bf16.msra.mxu0 %v591
  %659 = vmatpush.bf16.msra.mxu0 %v590
  %660 = vmatpush.bf16.msra.mxu0 %v589
  %661 = vmatmul.bf16.gmra.mxu0 %v389
  %v662 = vpop.f32.mrf.mxu0
  %v663 = vadd.f32 %v459, %v662
  %v664 = vpop.f32.mrf.mxu0
  %665 = vdwg.mxu0
  %666 = vmatpush.bf16.msra.mxu0 %v604
  %667 = vmatpush.bf16.msra.mxu0 %v603
  %668 = vmatpush.bf16.msra.mxu0 %v602
  %669 = vmatpush.bf16.msra.mxu0 %v601
  %670 = vmatpush.bf16.msra.mxu0 %v600
  %671 = vmatpush.bf16.msra.mxu0 %v599
  %672 = vmatpush.bf16.msra.mxu0 %v598
  %673 = vmatpush.bf16.msra.mxu0 %v597
  %674 = vmatmul.bf16.gmra.mxu0 %v390
  %v675 = vpop.f32.mrf.mxu0
  %v676 = vadd.f32 %v663, %v675
  %v677 = vpop.f32.mrf.mxu0
  %678 = vdwg.mxu0
  %679 = vmatpush.bf16.msra.mxu0 %v612
  %680 = vmatpush.bf16.msra.mxu0 %v611
  %681 = vmatpush.bf16.msra.mxu0 %v610
  %682 = vmatpush.bf16.msra.mxu0 %v609
  %683 = vmatpush.bf16.msra.mxu0 %v608
  %684 = vmatpush.bf16.msra.mxu0 %v607
  %685 = vmatpush.bf16.msra.mxu0 %v606
  %686 = vmatpush.bf16.msra.mxu0 %v605
  %687 = vmatmul.bf16.gmra.mxu0 %v391
  %v688 = vpop.f32.mrf.mxu0
  %v689 = vadd.f32 %v676, %v688
  %v690 = vpop.f32.mrf.mxu0
  %691 = vdwg.mxu0
  %692 = vmatpush.bf16.msra.mxu0 %v620
  %693 = vmatpush.bf16.msra.mxu0 %v619
  %694 = vmatpush.bf16.msra.mxu0 %v618
  %695 = vmatpush.bf16.msra.mxu0 %v617
  %696 = vmatpush.bf16.msra.mxu0 %v616
  %697 = vmatpush.bf16.msra.mxu0 %v615
  %698 = vmatpush.bf16.msra.mxu0 %v614
  %699 = vmatpush.bf16.msra.mxu0 %v613
  %700 = vmatmul.bf16.gmra.mxu0 %v392
  %v701 = vpop.f32.mrf.mxu0
  %v702 = vadd.f32 %v689, %v701
  %v703 = vpop.f32.mrf.mxu0
  %704 = vdwg.mxu0
  %v705 = vmax.f32 %v702, 0.0
  %v707 = vrot.slane %v705, 2
  %v709 = vsel %vm371, 0.0, %v707
  %v710 = vsel %vm371, %v707, 0.0
  %v711 = vrot.slane %v705, 4
  %v713 = vpack.c.bf16 %v709, %v709
  %v714 = vpack.c.bf16 %v705, %v705
  %v715 = vpack.c.bf16 %v711, %v711
  %v716 = vpack.c.bf16 %v710, %v710
  %v717 = vld [vmem:[%s5] sm:$0xf]
  %v718 = vld [vmem:[%s5 + $0x4] sm:$0xf]
  %v719 = vld [vmem:[%s5 + $0x8] sm:$0xf]
  %v720 = vld [vmem:[%s5 + $0xc] sm:$0xf]
  %v721 = vld [vmem:[%s5 + $0x10] sm:$0xf]
  %v722 = vld [vmem:[%s5 + $0x14] sm:$0xf]
  %v723 = vld [vmem:[%s5 + $0x18] sm:$0xf]
  %v724 = vld [vmem:[%s5 + $0x1c] sm:$0xf]
  %v725 = vld [vmem:[%s5 + $0x20] sm:$0xf]
  %v726 = vld [vmem:[%s5 + $0x24] sm:$0xf]
  %v727 = vld [vmem:[%s5 + $0x28] sm:$0xf]
  %v728 = vld [vmem:[%s5 + $0x2c] sm:$0xf]
  %v729 = vld [vmem:[%s5 + $0x30] sm:$0xf]
  %v730 = vld [vmem:[%s5 + $0x34] sm:$0xf]
  %v731 = vld [vmem:[%s5 + $0x38] sm:$0xf]
  %v732 = vld [vmem:[%s5 + $0x3c] sm:$0xf]
  %v733 = vld [vmem:[%s5 + $0x40] sm:$0xf]
  %v734 = vld [vmem:[%s5 + $0x44] sm:$0xf]
  %v735 = vld [vmem:[%s5 + $0x48] sm:$0xf]
  %v736 = vld [vmem:[%s5 + $0x4c] sm:$0xf]
  %v737 = vld [vmem:[%s5 + $0x50] sm:$0xf]
  %v738 = vld [vmem:[%s5 + $0x54] sm:$0xf]
  %v739 = vld [vmem:[%s5 + $0x58] sm:$0xf]
  %v740 = vld [vmem:[%s5 + $0x5c] sm:$0xf]
  %v741 = vld [vmem:[%s5 + $0x60] sm:$0xf]
  %v742 = vld [vmem:[%s5 + $0x64] sm:$0xf]
  %v743 = vld [vmem:[%s5 + $0x68] sm:$0xf]
  %v744 = vld [vmem:[%s5 + $0x6c] sm:$0xf]
  %v745 = vld [vmem:[%s5 + $0x70] sm:$0xf]
  %v746 = vld [vmem:[%s5 + $0x74] sm:$0xf]
  %v747 = vld [vmem:[%s5 + $0x78] sm:$0xf]
  %v748 = vld [vmem:[%s5 + $0x7c] sm:$0xf]
  %v749 = vld [vmem:[%s5 + $0x80] sm:$0xf]
  %v750 = vld [vmem:[%s5 + $0x84] sm:$0xf]
  %v751 = vld [vmem:[%s5 + $0x88] sm:$0xf]
  %v752 = vld [vmem:[%s5 + $0x8c] sm:$0xf]
  %v753 = vld [vmem:[%s5 + $0x90] sm:$0xf]
  %v754 = vld [vmem:[%s5 + $0x94] sm:$0xf]
  %v755 = vld [vmem:[%s5 + $0x98] sm:$0xf]
  %v756 = vld [vmem:[%s5 + $0x9c] sm:$0xf]
  %v757 = vld [vmem:[%s5 + $0xa0] sm:$0xf]
  %v758 = vld [vmem:[%s5 + $0xa4] sm:$0xf]
  %v759 = vld [vmem:[%s5 + $0xa8] sm:$0xf]
  %v760 = vld [vmem:[%s5 + $0xac] sm:$0xf]
  %v761 = vld [vmem:[%s5 + $0xb0] sm:$0xf]
  %v762 = vld [vmem:[%s5 + $0xb4] sm:$0xf]
  %v763 = vld [vmem:[%s5 + $0xb8] sm:$0xf]
  %v764 = vld [vmem:[%s5 + $0xbc] sm:$0xf]
  %v765 = vld [vmem:[%s5 + $0xc0] sm:$0xf]
  %v766 = vld [vmem:[%s5 + $0xc4] sm:$0xf]
  %v767 = vld [vmem:[%s5 + $0xc8] sm:$0xf]
  %v768 = vld [vmem:[%s5 + $0xcc] sm:$0xf]
  %v769 = vld [vmem:[%s5 + $0xd0] sm:$0xf]
  %v770 = vld [vmem:[%s5 + $0xd4] sm:$0xf]
  %v771 = vld [vmem:[%s5 + $0xd8] sm:$0xf]
  %v772 = vld [vmem:[%s5 + $0xdc] sm:$0xf]
  %v773 = vld [vmem:[%s5 + $0xe0] sm:$0xf]
  %v774 = vld [vmem:[%s5 + $0xe4] sm:$0xf]
  %v775 = vld [vmem:[%s5 + $0xe8] sm:$0xf]
  %v776 = vld [vmem:[%s5 + $0xec] sm:$0xf]
  %v777 = vld [vmem:[%s5 + $0xf0] sm:$0xf]
  %v778 = vld [vmem:[%s5 + $0xf4] sm:$0xf]
  %v779 = vld [vmem:[%s5 + $0xf8] sm:$0xf]
  %v780 = vld [vmem:[%s5 + $0xfc] sm:$0xf]
  %v781 = vld [vmem:[%s6] sm:$0x1]
  %v783 = vperm.slane %v781, 0
  %v849 = vunpack.c.l.b16 %v717
  %v850 = vunpack.c.l.b16 %v718
  %v851 = vunpack.c.l.b16 %v719
  %v852 = vunpack.c.l.b16 %v720
  %v853 = vunpack.c.l.b16 %v721
  %v854 = vunpack.c.l.b16 %v722
  %v855 = vunpack.c.l.b16 %v723
  %v856 = vunpack.c.l.b16 %v724
  %v857 = vunpack.c.l.b16 %v725
  %v858 = vunpack.c.l.b16 %v726
  %v859 = vunpack.c.l.b16 %v727
  %v860 = vunpack.c.l.b16 %v728
  %v861 = vunpack.c.l.b16 %v729
  %v862 = vunpack.c.l.b16 %v730
  %v863 = vunpack.c.l.b16 %v731
  %v864 = vunpack.c.l.b16 %v732
  %v865 = vunpack.c.l.b16 %v733
  %v866 = vunpack.c.l.b16 %v734
  %v867 = vunpack.c.l.b16 %v735
  %v868 = vunpack.c.l.b16 %v736
  %v869 = vunpack.c.l.b16 %v737
  %v870 = vunpack.c.l.b16 %v738
  %v871 = vunpack.c.l.b16 %v739
  %v872 = vunpack.c.l.b16 %v740
  %v873 = vunpack.c.l.b16 %v741
  %v874 = vunpack.c.l.b16 %v742
  %v875 = vunpack.c.l.b16 %v743
  %v876 = vunpack.c.l.b16 %v744
  %v877 = vunpack.c.l.b16 %v745
  %v878 = vunpack.c.l.b16 %v746
  %v879 = vunpack.c.l.b16 %v747
  %v880 = vunpack.c.l.b16 %v748
  %v881 = vunpack.c.l.b16 %v749
  %v882 = vunpack.c.l.b16 %v750
  %v883 = vunpack.c.l.b16 %v751
  %v884 = vunpack.c.l.b16 %v752
  %v885 = vunpack.c.l.b16 %v753
  %v886 = vunpack.c.l.b16 %v754
  %v887 = vunpack.c.l.b16 %v755
  %v888 = vunpack.c.l.b16 %v756
  %v889 = vunpack.c.l.b16 %v757
  %v890 = vunpack.c.l.b16 %v758
  %v891 = vunpack.c.l.b16 %v759
  %v892 = vunpack.c.l.b16 %v760
  %v893 = vunpack.c.l.b16 %v761
  %v894 = vunpack.c.l.b16 %v762
  %v895 = vunpack.c.l.b16 %v763
  %v896 = vunpack.c.l.b16 %v764
  %v897 = vunpack.c.l.b16 %v765
  %v898 = vunpack.c.l.b16 %v766
  %v899 = vunpack.c.l.b16 %v767
  %v900 = vunpack.c.l.b16 %v768
  %v901 = vunpack.c.l.b16 %v769
  %v902 = vunpack.c.l.b16 %v770
  %v903 = vunpack.c.l.b16 %v771
  %v904 = vunpack.c.l.b16 %v772
  %v905 = vunpack.c.l.b16 %v773
  %v906 = vunpack.c.l.b16 %v774
  %v907 = vunpack.c.l.b16 %v775
  %v908 = vunpack.c.l.b16 %v776
  %v909 = vunpack.c.l.b16 %v777
  %v910 = vunpack.c.l.b16 %v778
  %v911 = vunpack.c.l.b16 %v779
  %v912 = vunpack.c.l.b16 %v780
  %v913 = vpack.c.b16 %v850, %v849
  %v914 = vpack.c.b16 %v852, %v851
  %v915 = vpack.c.b16 %v854, %v853
  %v916 = vpack.c.b16 %v856, %v855
  %v917 = vpack.c.b16 %v858, %v857
  %v918 = vpack.c.b16 %v860, %v859
  %v919 = vpack.c.b16 %v862, %v861
  %v920 = vpack.c.b16 %v864, %v863
  %v921 = vpack.c.b16 %v866, %v865
  %v922 = vpack.c.b16 %v868, %v867
  %v923 = vpack.c.b16 %v870, %v869
  %v924 = vpack.c.b16 %v872, %v871
  %v925 = vpack.c.b16 %v874, %v873
  %v926 = vpack.c.b16 %v876, %v875
  %v927 = vpack.c.b16 %v878, %v877
  %v928 = vpack.c.b16 %v880, %v879
  %v929 = vpack.c.b16 %v882, %v881
  %v930 = vpack.c.b16 %v884, %v883
  %v931 = vpack.c.b16 %v886, %v885
  %v932 = vpack.c.b16 %v888, %v887
  %v933 = vpack.c.b16 %v890, %v889
  %v934 = vpack.c.b16 %v892, %v891
  %v935 = vpack.c.b16 %v894, %v893
  %v936 = vpack.c.b16 %v896, %v895
  %v937 = vpack.c.b16 %v898, %v897
  %v938 = vpack.c.b16 %v900, %v899
  %v939 = vpack.c.b16 %v902, %v901
  %v940 = vpack.c.b16 %v904, %v903
  %v941 = vpack.c.b16 %v906, %v905
  %v942 = vpack.c.b16 %v908, %v907
  %v943 = vpack.c.b16 %v910, %v909
  %v944 = vpack.c.b16 %v912, %v911
  %977 = vmatpush.bf16.msra.mxu0 %v920
  %978 = vmatpush.bf16.msra.mxu0 %v919
  %979 = vmatpush.bf16.msra.mxu0 %v918
  %980 = vmatpush.bf16.msra.mxu0 %v917
  %981 = vmatpush.bf16.msra.mxu0 %v916
  %982 = vmatpush.bf16.msra.mxu0 %v915
  %983 = vmatpush.bf16.msra.mxu0 %v914
  %984 = vmatpush.bf16.msra.mxu0 %v913
  %985 = vmatmul.bf16.gmra.mxu0 %v713
  %v986 = vpop.f32.mrf.mxu0
  %v987 = vadd.f32 %v783, %v986
  %v988 = vpop.f32.mrf.mxu0
  %989 = vdwg.mxu0
  %990 = vmatpush.bf16.msra.mxu0 %v928
  %991 = vmatpush.bf16.msra.mxu0 %v927
  %992 = vmatpush.bf16.msra.mxu0 %v926
  %993 = vmatpush.bf16.msra.mxu0 %v925
  %994 = vmatpush.bf16.msra.mxu0 %v924
  %995 = vmatpush.bf16.msra.mxu0 %v923
  %996 = vmatpush.bf16.msra.mxu0 %v922
  %997 = vmatpush.bf16.msra.mxu0 %v921
  %998 = vmatmul.bf16.gmra.mxu0 %v714
  %v999 = vpop.f32.mrf.mxu0
  %v1000 = vadd.f32 %v987, %v999
  %v1001 = vpop.f32.mrf.mxu0
  %1002 = vdwg.mxu0
  %1003 = vmatpush.bf16.msra.mxu0 %v936
  %1004 = vmatpush.bf16.msra.mxu0 %v935
  %1005 = vmatpush.bf16.msra.mxu0 %v934
  %1006 = vmatpush.bf16.msra.mxu0 %v933
  %1007 = vmatpush.bf16.msra.mxu0 %v932
  %1008 = vmatpush.bf16.msra.mxu0 %v931
  %1009 = vmatpush.bf16.msra.mxu0 %v930
  %1010 = vmatpush.bf16.msra.mxu0 %v929
  %1011 = vmatmul.bf16.gmra.mxu0 %v715
  %v1012 = vpop.f32.mrf.mxu0
  %v1013 = vadd.f32 %v1000, %v1012
  %v1014 = vpop.f32.mrf.mxu0
  %1015 = vdwg.mxu0
  %1016 = vmatpush.bf16.msra.mxu0 %v944
  %1017 = vmatpush.bf16.msra.mxu0 %v943
  %1018 = vmatpush.bf16.msra.mxu0 %v942
  %1019 = vmatpush.bf16.msra.mxu0 %v941
  %1020 = vmatpush.bf16.msra.mxu0 %v940
  %1021 = vmatpush.bf16.msra.mxu0 %v939
  %1022 = vmatpush.bf16.msra.mxu0 %v938
  %1023 = vmatpush.bf16.msra.mxu0 %v937
  %1024 = vmatmul.bf16.gmra.mxu0 %v716
  %v1025 = vpop.f32.mrf.mxu0
  %v1026 = vadd.f32 %v1013, %v1025
  %v1027 = vpop.f32.mrf.mxu0
  %1028 = vdwg.mxu0
  %v1029 = vmax.f32 %v1026, 0.0
  %1030 = vst [vmem:[%s7] sm:$0xf] %v1029
  // Predicated region
  $region30: #{vae_encoder_forward.1} parent=0 // pred_check
    _
  $region31: #{vae_encoder_forward.1} parent=0 // pred_check_branch
    %1032 = sbr.rel (0) target = $region33
  $region32: #{vae_encoder_forward.1} parent=0 // pred_region
    _
  $region33: #{vae_encoder_forward.1} parent=0 // pred_fallthru
    _
  // Predicated region
  $region34: #{vae_encoder_forward.1} parent=0 // pred_check
    _
  $region35: #{vae_encoder_forward.1} parent=0 // pred_check_branch
    %1034 = sbr.rel (0) target = $region37
  $region36: #{vae_encoder_forward.1} parent=0 // pred_region
    _
  $region37: #{vae_encoder_forward.1} parent=0 // pred_fallthru
    _

</llo_original>
